<compile_context>
chip_gen: v5e
topology: v5e:2x2
jax: 0.10.0
libtpu: 0.0.40
codegen_flags: <defaults>
</compile_context>

<pallas_src>
import functools

import jax
import jax.numpy as jnp
from jax.experimental import pallas as pl
from jax.experimental.pallas import tpu as pltpu

_LANE = 128
_MAX_PIXEL_TILE = 128 * 1024      # review: 32K-128K px/step for small channel counts
_MIN_GRID_STEPS = 8               # keep both v7x TensorCores fed + pipeline overlap


def _round_up(a, m):
    return -(-a // m) * m


def _vmem_budget_and_limit():
    """Generation-aware VMEM tiling budget and explicit scoped-VMEM limit."""
    phys = 64 * 1024 * 1024                       # conservative default: v7x
    try:
        info = pltpu.get_tpu_info()
        cap = getattr(info, "vmem_capacity_bytes", None)
        if cap:
            phys = int(cap)
    except Exception:
        pass
    if phys >= 96 * 1024 * 1024:                  # v5e / v6e: 128 MiB physical
        budget = 64 * 1024 * 1024
    else:                                         # v7x: 64 MiB physical
        budget = 40 * 1024 * 1024
    limit = min(budget + 8 * 1024 * 1024, phys - 4 * 1024 * 1024)
    return budget, int(limit)


def _choose_pixel_tile(P, Cin, Cout, itemsize, N, vmem_budget):
    """Largest lane-aligned pixel tile that fits the VMEM budget (with sublane
    padding + double buffering accounted), while keeping >= _MIN_GRID_STEPS
    grid steps when possible and balancing tiles so the last block isn't
    nearly empty."""
    sub = 8 * (4 // itemsize)                     # sublane multiple: 8 f32 / 16 bf16
    # Double-buffered x + out blocks: bytes per lane column (sublane padded).
    per_lane = (_round_up(Cin, sub) + _round_up(Cout, sub)) * itemsize * 2
    # Grid-invariant weight (x.dtype) + f32 bias blocks, counted double-buffered.
    fixed = (_round_up(Cout, sub) * _round_up(Cin, _LANE) * itemsize
             + _round_up(Cout, 8) * _LANE * 4) * 2
    avail = max(vmem_budget - fixed, per_lane * _LANE)
    tp_cap = max(_LANE, (avail // per_lane) // _LANE * _LANE)
    tp_cap = min(tp_cap, _MAX_PIXEL_TILE)

    tiles = -(-P // tp_cap)                       # minimum tiles that fit VMEM
    want = -(-_MIN_GRID_STEPS // N)               # tiles wanted for megacore/pipeline
    tiles = max(tiles, min(want, P // _LANE if P > _LANE else 1), 1)
    if tiles == 1:
        return P                                  # full axis -> always legal
    tp = _round_up(-(-P // tiles), _LANE)         # balanced, lane-aligned
    return P if tp >= P else tp


# ----------------------------- Pallas kernel --------------------------------
def _conv1x1_relu_kernel(x_ref, w_ref, b_ref, o_ref):
    # x_ref: (Cin, TP)   w_ref: (Cout, Cin)   b_ref: (Cout, 1)   o_ref: (Cout, TP)
    acc = jnp.dot(w_ref[...], x_ref[...], preferred_element_type=jnp.float32)
    acc = acc + b_ref[...]                        # f32 bias, broadcast over lanes
    o_ref[...] = jnp.maximum(acc, 0.0).astype(o_ref.dtype)
    # TODO(synk): if production Cin/Cout grow past ~128 the op flips MXU-bound;
    # add a K grid axis ("arbitrary") with an f32 VMEM accumulator and tile
    # Cout/Cin toward the MXU native shape instead of this degenerate-K matmul.


def conv1x1_relu_nchw(x, w, b):
    """relu(W @ x[n] + b) per batch element, lane-dense over the pixel axis.

    x: (N, Cin, P) with P = H*W (NCHW flattened -- no transpose needed)
    w: (Cout, Cin)
    b: (Cout,)   (f32 epilogue)
    returns (N, Cout, P) in x.dtype
    """
    N, Cin, P = x.shape
    Cout = w.shape[0]

    w = w.astype(x.dtype)
    b2 = b.reshape(Cout, 1).astype(jnp.float32)

    budget, vmem_limit = _vmem_budget_and_limit()
    tp = _choose_pixel_tile(P, Cin, Cout, x.dtype.itemsize, N, budget)
    grid = (N, pl.cdiv(P, tp))

    return pl.pallas_call(
        _conv1x1_relu_kernel,
        out_shape=jax.ShapeDtypeStruct((N, Cout, P), x.dtype),
        grid_spec=pltpu.PrefetchScalarGridSpec(
            num_scalar_prefetch=0,
            grid=grid,
            in_specs=[
                # batch dim squeezed; big pixel axis last (lane-dense)
                pl.BlockSpec((None, Cin, tp), lambda n, p: (n, 0, p)),
                pl.BlockSpec((Cout, Cin), lambda n, p: (0, 0)),   # grid-invariant
                pl.BlockSpec((Cout, 1), lambda n, p: (0, 0)),     # grid-invariant
            ],
            out_specs=pl.BlockSpec((None, Cout, tp), lambda n, p: (n, 0, p)),
        ),
        compiler_params=pltpu.CompilerParams(
            dimension_semantics=("parallel", "parallel"),
            vmem_limit_bytes=vmem_limit),
    )(x, w, b2)


# ----------------------------- parameter init -------------------------------
def icnr_weight(key, n_channels, scale=2, dtype=jnp.float32):
    """ICNR init for a 1x1 conv weight (Cout, Cin, 1, 1), Cout = C*scale^2."""
    ni = n_channels * scale ** 2   # Cout
    nf = n_channels                # Cin
    h = w = 1
    ni2 = ni // scale ** 2
    fan_in = nf * h * w
    std = (2.0 / fan_in) ** 0.5    # kaiming_normal_, fan_in, relu gain
    k = jax.random.normal(key, (ni2, nf, h, w), dtype=dtype) * std
    k = jnp.swapaxes(k, 0, 1)                 # (nf, ni2, h, w)
    k = k.reshape(ni2, nf, -1)                # (ni2, nf, h*w)
    k = jnp.tile(k, (1, 1, scale ** 2))       # repeat(1, 1, scale^2)
    k = k.reshape(nf, ni, h, w)
    k = jnp.swapaxes(k, 0, 1)                 # (Cout, Cin, 1, 1)
    return k


def conv_bias(key, cin, cout, dtype=jnp.float32):
    bound = 1.0 / (cin ** 0.5)
    return jax.random.uniform(key, (cout,), dtype=dtype, minval=-bound, maxval=bound)


# ------------------------------ module forward ------------------------------
@functools.partial(jax.jit, static_argnames=("scale",))
def pixel_shuffle_forward(x, weight, bias, *, scale=2):
    """x: (N, C, H, W) NCHW. weight: (C*s^2, C, 1, 1). Returns (N, C, H*s, W*s)."""
    N, C, H, W = x.shape
    s = scale
    Cout = C * s * s

    # 1x1 conv == channel matmul computed directly on the NCHW layout.
    x_flat = x.reshape(N, C, H * W)            # free view, no data movement
    w_mat = weight.reshape(Cout, C)            # (Cout, Cin)

    y = conv1x1_relu_nchw(x_flat, w_mat, bias)           # (N, Cout, H*W), relu'd

    # PixelShuffle: out[n, c, h*s+i, w*s+j] = y[n, c*s^2 + i*s + j, h, w]
    # TODO(synk): fuse this transpose into the kernel output layout (see header).
    y = y.reshape(N, C, s, s, H, W)
    y = jnp.transpose(y, (0, 1, 4, 2, 5, 3))
    return y.reshape(N, C, H * s, W * s)


# ------------------------------- reference -----------------------------------
def _reference(x, weight, bias, scale):
    N, C, H, W = x.shape
    s = scale
    Cout = C * s * s
    y = jnp.einsum("nchw,oc->nohw", x, weight.reshape(Cout, C))
    y = jnp.maximum(y + bias[None, :, None, None], 0.0)
    y = y.reshape(N, C, s, s, H, W)
    y = jnp.transpose(y, (0, 1, 4, 2, 5, 3))
    return y.reshape(N, C, H * s, W * s)


# ----------------------------------- main ------------------------------------
if __name__ == "__main__":
    key = jax.random.PRNGKey(0)
    k_x, k_w, k_b = jax.random.split(key, 3)

    N, C, H, W = 2, 4, 16, 16
    scale = 2

    x = jax.random.normal(k_x, (N, C, H, W), dtype=jnp.float32)
    weight = icnr_weight(k_w, C, scale=scale)                 # (C*s^2, C, 1, 1)
    bias = conv_bias(k_b, C, C * scale ** 2)                  # (C*s^2,)

    # --- f32 path ---
    out = pixel_shuffle_forward(x, weight, bias, scale=scale)
    out = jax.block_until_ready(out)
    y_ref = _reference(x, weight, bias, scale)
    assert out.shape == (N, C, H * scale, W * scale)
    assert jnp.allclose(out, y_ref, atol=1e-4, rtol=1e-4)

    # --- bf16 I/O path (halved HBM traffic; f32 accumulation + epilogue) ---
    xb = x.astype(jnp.bfloat16)
    wb = weight.astype(jnp.bfloat16)
    out_bf16 = pixel_shuffle_forward(xb, wb, bias, scale=scale)
    out_bf16 = jax.block_until_ready(out_bf16)
    y_ref_b = _reference(xb.astype(jnp.float32), wb.astype(jnp.float32), bias, scale)
    assert out_bf16.shape == (N, C, H * scale, W * scale)
    assert jnp.allclose(out_bf16.astype(jnp.float32), y_ref_b, atol=1e-2, rtol=1e-2)

    print("KERNEL_OK")
</pallas_src>

<mosaic_0001>
module attributes {stable_mosaic.version = 11 : i64} {
  func.func @_conv1x1_relu_kernel(%arg0: i32, %arg1: i32, %arg2: memref<1x4x128xf32, #tpu.memory_space<vmem>>, %arg3: memref<16x4xf32, #tpu.memory_space<vmem>>, %arg4: memref<16x1xf32, #tpu.memory_space<vmem>>, %arg5: memref<1x16x128xf32, #tpu.memory_space<vmem>>) attributes {dimension_semantics = [#tpu.dimension_semantics<parallel>, #tpu.dimension_semantics<parallel>], iteration_bounds = array<i64: 2, 2>, scalar_prefetch = 0 : i64, scratch_operands = 0 : i64, tpu.core_type = #tpu.core_type<tc>, window_params = [{transform_indices = @transform_0, window_bounds = array<i64: 1, 4, 128>}, {pipeline_mode = #tpu.pipeline_mode<synchronous>, transform_indices = @transform_1, window_bounds = array<i64: 16, 4>}, {pipeline_mode = #tpu.pipeline_mode<synchronous>, transform_indices = @transform_2, window_bounds = array<i64: 16, 1>}, {transform_indices = @transform_3, window_bounds = array<i64: 1, 16, 128>}]} {
    %c0 = arith.constant 0 : index
    %c0_0 = arith.constant 0 : index
    %0 = vector.load %arg3[%c0, %c0_0] : memref<16x4xf32, #tpu.memory_space<vmem>>, vector<16x4xf32>
    %c0_1 = arith.constant 0 : index
    %c0_2 = arith.constant 0 : index
    %c0_3 = arith.constant 0 : index
    %1 = vector.load %arg2[%c0_1, %c0_2, %c0_3] : memref<1x4x128xf32, #tpu.memory_space<vmem>>, vector<1x4x128xf32>
    %2 = vector.shape_cast %1 : vector<1x4x128xf32> to vector<4x128xf32>
    %cst = arith.constant dense<0.000000e+00> : vector<16x128xf32>
    %3 = tpu.matmul %0, %2, %cst {dimension_numbers = #tpu.dot_dimension_numbers<[1], [0], [0], [1], [0, 0, 1, 1], [], []>} : vector<16x4xf32>, vector<4x128xf32>, vector<16x128xf32> -> vector<16x128xf32>
    %c0_4 = arith.constant 0 : index
    %c0_5 = arith.constant 0 : index
    %4 = vector.load %arg4[%c0_4, %c0_5] : memref<16x1xf32, #tpu.memory_space<vmem>>, vector<16x1xf32>
    %5 = vector.broadcast %4 : vector<16x1xf32> to vector<16x128xf32>
    %6 = arith.addf %3, %5 : vector<16x128xf32>
    %cst_6 = arith.constant 0.000000e+00 : f32
    %7 = vector.broadcast %cst_6 : f32 to vector<16x128xf32>
    %8 = arith.maximumf %6, %7 : vector<16x128xf32>
    %c0_7 = arith.constant 0 : index
    %c0_8 = arith.constant 0 : index
    %c0_9 = arith.constant 0 : index
    %9 = vector.load %arg5[%c0_7, %c0_8, %c0_9] : memref<1x16x128xf32, #tpu.memory_space<vmem>>, vector<1x16x128xf32>
    %10 = vector.shape_cast %9 : vector<1x16x128xf32> to vector<16x128xf32>
    %11 = vector.shape_cast %8 : vector<16x128xf32> to vector<1x16x128xf32>
    tpu.vector_store %arg5[%c0_7, %c0_8, %c0_9], %11 {strides = array<i32>} : memref<1x16x128xf32, #tpu.memory_space<vmem>>, vector<1x16x128xf32>,
    return
  }
  func.func @transform_0(%arg0: i32, %arg1: i32) -> (i32, i32, i32) {
    %c0_i32 = arith.constant 0 : i32
    %c0_i32_0 = arith.constant 0 : i32
    return %arg0, %c0_i32, %arg1 : i32, i32, i32
  }
  func.func @transform_1(%arg0: i32, %arg1: i32) -> (i32, i32) {
    %c0_i32 = arith.constant 0 : i32
    %c0_i32_0 = arith.constant 0 : i32
    %c0_i32_1 = arith.constant 0 : i32
    return %c0_i32, %c0_i32_0 : i32, i32
  }
  func.func @transform_2(%arg0: i32, %arg1: i32) -> (i32, i32) {
    %c0_i32 = arith.constant 0 : i32
    %c0_i32_0 = arith.constant 0 : i32
    %c0_i32_1 = arith.constant 0 : i32
    return %c0_i32, %c0_i32_0 : i32, i32
  }
  func.func @transform_3(%arg0: i32, %arg1: i32) -> (i32, i32, i32) {
    %c0_i32 = arith.constant 0 : i32
    %c0_i32_0 = arith.constant 0 : i32
    return %arg0, %c0_i32, %arg1 : i32, i32, i32
  }
}

</mosaic_0001>

<llo_original>
// kernel: pixel_shuffle_forward.1
$region0: #{pixel_shuffle_forward.1}
  #allocation0 [shape = 'u32[]', space=smem, size = 0x4, offset = 0x4, fixed_abs, tag = 'smem constant byte address 0x4 - core index']
  #allocation1 [shape = 'u32[72,128]{1,0:T(1,128)}', space=vmem, size = 0x9000, scoped, tag = 'internal scratch']
  %s0 = inlined_call_operand.vmem [shape: f32[2,4,256], index: 0, kind: input, shape index: {}]
  %s1 = inlined_call_operand.vmem [shape: f32[16,4], index: 1, kind: input, shape index: {}]
  %s2 = inlined_call_operand.vmem [shape: f32[16,1], index: 2, kind: input, shape index: {}]
  %s3 = inlined_call_operand.vmem [shape: f32[2,16,256], index: 3, kind: output, shape index: {}]
  %s4 = sld [smem:[#allocation0]]
  $region79: #{pixel_shuffle_forward.1} parent=0
    _
  %s6 = ssub.s32 1, %s4
  %s7 = scalar_select 0, %s6, %s4
  $region1: #{pixel_shuffle_forward.1} parent=0
    #allocation2 [shape = 'u8[16384]{0}', space=vmem, size = 0x4000, scoped, tag = 'output window, operand 0']
    loop: start=0, step=1, limit=6
    $region2: #{pixel_shuffle_forward.1} parent=1 // loop_pre_header
      _
    $region3: #{pixel_shuffle_forward.1} parent=1 // loop_header
      %s9 = sphi 0, %s13
      %p10 = scmp.ge.s32.totalorder %s9, 6
      %s16 = sphi 0, %s28
      %s17 = sphi 0, %s24
      %s18 = sphi 0, %s16
      %s19 = sphi 0, %s17
      %s20 = sphi 0, %s18
      %s21 = sphi 0, %s19
      %s33 = sphi 0, %s35
      %s36 = sphi 0, %s33
      %s37 = sphi 0, %s36
      %s53 = sphi 0, %s37
      %s57 = sphi 0, %s57
      %s59 = sphi 0, %s57
      %s60 = sphi 0, %s59
      %s74 = sphi 0, %s60
      %s78 = sphi 0, %s78
      %s80 = sphi 0, %s78
      %s81 = sphi 0, %s80
      %s95 = sphi 0, %s81
      %s103 = sphi 0, %s105
      %s106 = sphi 0, %s103
      %s107 = sphi 0, %s106
      %s123 = sphi 0, %s107
    $region4: #{pixel_shuffle_forward.1} parent=1 // loop_header_branch
      %12 = sbr.rel (%p10) target = $region8
    $region5: #{pixel_shuffle_forward.1} parent=1 // loop_body
      %s14 = ssub.s32 %s9, 1
      %s15 = ssub.s32 %s9, 2
      %s22 = sadd.s32 1, %s17
      %p23 = scmp.ge.s32.totalorder %s22, 2
      %s24 = scalar_select %p23, 0, %s22
      %s25 = sadd.s32 1, %s16
      %s26 = scalar_select %p23, %s25, %s16
      %p27 = scmp.ge.s32.totalorder %s26, 2
      %s28 = scalar_select %p27, 0, %s26
      %s29 = ssub.s32 %s16, %s28
      %s30 = ssub.s32 %s17, %s24
      %s31 = sor.u32 %s29, %s30
      %p32 = scmp.eq.s32.totalorder %s31, 0
      %s34 = sadd.s32 %s33, 1
      %s35 = scalar_select %p32, %s33, %s34
      %p38 = pneg %p32
      %p39 = scmp.eq.s32.totalorder %s9, 3
      %p40 = por %p38, %p39
      %p41 = scmp.ne.s32.totalorder %s33, %s36
      %p42 = scmp.eq.s32.totalorder %s9, 0
      %p43 = por %p41, %p42
      %p44 = scmp.ne.s32.totalorder %s33, %s36
      %p45 = scmp.eq.s32.totalorder %s14, 3
      %p46 = por %p44, %p45
      %p47 = scmp.ne.s32.totalorder %s36, %s37
      %p48 = scmp.eq.s32.totalorder %s14, 0
      %p49 = por %p47, %p48
      %p50 = scmp.ne.s32.totalorder %s36, %s37
      %p51 = scmp.eq.s32.totalorder %s15, 3
      %p52 = por %p50, %p51
      %p54 = scmp.ne.s32.totalorder %s37, %s53
      %p55 = scmp.eq.s32.totalorder %s15, 0
      %p56 = por %p54, %p55
      %s58 = sadd.s32 %s57, 1
      %p61 = scmp.eq.s32.totalorder %s9, 3
      %p62 = scmp.ne.s32.totalorder %s57, %s59
      %p63 = scmp.eq.s32.totalorder %s9, 0
      %p64 = por %p62, %p63
      %p65 = scmp.ne.s32.totalorder %s57, %s59
      %p66 = scmp.eq.s32.totalorder %s14, 3
      %p67 = por %p65, %p66
      %p68 = scmp.ne.s32.totalorder %s59, %s60
      %p69 = scmp.eq.s32.totalorder %s14, 0
      %p70 = por %p68, %p69
      %p71 = scmp.ne.s32.totalorder %s59, %s60
      %p72 = scmp.eq.s32.totalorder %s15, 3
      %p73 = por %p71, %p72
      %p75 = scmp.ne.s32.totalorder %s60, %s74
      %p76 = scmp.eq.s32.totalorder %s15, 0
      %p77 = por %p75, %p76
      %s79 = sadd.s32 %s78, 1
      %p82 = scmp.eq.s32.totalorder %s9, 3
      %p83 = scmp.ne.s32.totalorder %s78, %s80
      %p84 = scmp.eq.s32.totalorder %s9, 0
      %p85 = por %p83, %p84
      %p86 = scmp.ne.s32.totalorder %s78, %s80
      %p87 = scmp.eq.s32.totalorder %s14, 3
      %p88 = por %p86, %p87
      %p89 = scmp.ne.s32.totalorder %s80, %s81
      %p90 = scmp.eq.s32.totalorder %s14, 0
      %p91 = por %p89, %p90
      %p92 = scmp.ne.s32.totalorder %s80, %s81
      %p93 = scmp.eq.s32.totalorder %s15, 3
      %p94 = por %p92, %p93
      %p96 = scmp.ne.s32.totalorder %s81, %s95
      %p97 = scmp.eq.s32.totalorder %s15, 0
      %p98 = por %p96, %p97
      %s99 = ssub.s32 %s16, %s28
      %s100 = ssub.s32 %s17, %s24
      %s101 = sor.u32 %s99, %s100
      %p102 = scmp.eq.s32.totalorder %s101, 0
      %s104 = sadd.s32 %s103, 1
      %s105 = scalar_select %p102, %s103, %s104
      %p108 = pneg %p102
      %p109 = scmp.eq.s32.totalorder %s9, 3
      %p110 = por %p108, %p109
      %p111 = scmp.ne.s32.totalorder %s103, %s106
      %p112 = scmp.eq.s32.totalorder %s9, 0
      %p113 = por %p111, %p112
      %p114 = scmp.ne.s32.totalorder %s103, %s106
      %p115 = scmp.eq.s32.totalorder %s14, 3
      %p116 = por %p114, %p115
      %p117 = scmp.ne.s32.totalorder %s106, %s107
      %p118 = scmp.eq.s32.totalorder %s14, 0
      %p119 = por %p117, %p118
      %p120 = scmp.ne.s32.totalorder %s106, %s107
      %p121 = scmp.eq.s32.totalorder %s15, 3
      %p122 = por %p120, %p121
      %p124 = scmp.ne.s32.totalorder %s107, %s123
      %p125 = scmp.eq.s32.totalorder %s15, 0
      %p126 = por %p124, %p125
      %p127 = scmp.le.s32.totalorder 1, %s9
      %p128 = scmp.lt.s32.totalorder %s9, 5
      %p129 = pnand %p127, %p128
      %p130 = pneg %p129
      // Predicated region
      $region9: #{pixel_shuffle_forward.1} parent=5 // pred_check
        _
      $region10: #{pixel_shuffle_forward.1} parent=5 // pred_check_branch
        %132 = sbr.rel (%p129) target = $region12
      $region11: #{pixel_shuffle_forward.1} parent=5 // pred_region
        %s133 = ssub.s32 %s9, 1
        // Predicated region
        $region13: #{pixel_shuffle_forward.1} parent=11 // pred_check
          %p134 = pneg %p70
        $region14: #{pixel_shuffle_forward.1} parent=11 // pred_check_branch
          %136 = sbr.rel (%p134) target = $region16
        $region15: #{pixel_shuffle_forward.1} parent=11 // pred_region
          _
        $region16: #{pixel_shuffle_forward.1} parent=11 // pred_fallthru
          _
        // Predicated region
        $region17: #{pixel_shuffle_forward.1} parent=11 // pred_check
          %p137 = pneg %p91
        $region18: #{pixel_shuffle_forward.1} parent=11 // pred_check_branch
          %139 = sbr.rel (%p137) target = $region20
        $region19: #{pixel_shuffle_forward.1} parent=11 // pred_region
          _
        $region20: #{pixel_shuffle_forward.1} parent=11 // pred_fallthru
          _
      $region12: #{pixel_shuffle_forward.1} parent=5 // pred_fallthru
        _
      %p140 = scmp.lt.s32.totalorder %s9, 4
      // Predicated region
      $region21: #{pixel_shuffle_forward.1} parent=5 // pred_check
        %p141 = pneg %p140
      $region22: #{pixel_shuffle_forward.1} parent=5 // pred_check_branch
        %143 = sbr.rel (%p141) target = $region24
      $region23: #{pixel_shuffle_forward.1} parent=5 // pred_region
        // Predicated region
        $region25: #{pixel_shuffle_forward.1} parent=23 // pred_check
          %p144 = pneg %p43
        $region26: #{pixel_shuffle_forward.1} parent=23 // pred_check_branch
          %146 = sbr.rel (%p144) target = $region28
        $region27: #{pixel_shuffle_forward.1} parent=23 // pred_region
          %p147 = scmp.lt.s32.totalorder %s16, 1
          %s148 = scalar_select %p147, %s16, 1
          %p149 = scmp.lt.s32.totalorder %s17, 1
          %s150 = scalar_select %p149, %s17, 1
          %s151 = smul.addr %s148, 2
          %s152 = sadd.s32 %s150, %s151
          %s153 = smul.addr %s152, 4
          %s154 = scalar_lea.vmem %s0, %s153
        $region28: #{pixel_shuffle_forward.1} parent=23 // pred_fallthru
          _
      $region24: #{pixel_shuffle_forward.1} parent=5 // pred_fallthru
        _
      %p155 = scmp.le.s32.totalorder 1, %s9
      %p156 = scmp.lt.s32.totalorder %s9, 5
      %p157 = pnand %p155, %p156
      %p158 = pneg %p157
      // Predicated region
      $region29: #{pixel_shuffle_forward.1} parent=5 // pred_check
        _
      $region30: #{pixel_shuffle_forward.1} parent=5 // pred_check_branch
        %160 = sbr.rel (%p157) target = $region32
      $region31: #{pixel_shuffle_forward.1} parent=5 // pred_region
        %s161 = ssub.s32 %s9, 1
        %p162 = scmp.lt.s32.totalorder %s18, 1
        %s163 = scalar_select %p162, %s18, 1
        %p164 = scmp.lt.s32.totalorder %s19, 1
        %s165 = scalar_select %p164, %s19, 1
        %s166 = smul.addr %s163, 2
        %s167 = sadd.s32 %s165, %s166
        %s168 = smul.addr %s167, 4
        %s169 = scalar_lea.vmem %s0, %s168
        %p170 = pneg %p49
        %p171 = pneg %p46
        %p172 = pneg %p70
        %p173 = pneg %p67
        %p174 = pneg %p91
        %p175 = pneg %p88
        %p176 = pneg %p119
        %p177 = pneg %p116
        %s178 = sand.u32 %s106, 1
        %s179 = sand.u32 %s106, 1
        %s180 = smul.addr %s179, 16
        %s181 = scalar_lea.vmem [#allocation2], %s180
        %p182 = scmp.lt.s32.totalorder %s18, 1
        %s183 = scalar_select %p182, %s18, 1
        %p184 = scmp.lt.s32.totalorder %s19, 1
        %s185 = scalar_select %p184, %s19, 1
        %s186 = smul.addr %s183, 2
        %s187 = sadd.s32 %s185, %s186
        %s188 = smul.addr %s187, 4
        %s189 = scalar_lea.vmem %s0, %s188
        %v190 = vld [vmem:[%s1] sm:$0xff]
        %v191 = vld [vmem:[%s1 + $0x8] sm:$0xff]
        %v192 = vld [vmem:[%s189] sm:$0xf]
        %v193 = vld [vmem:[%s2] sm:$0xff]
        %v194 = vld [vmem:[%s2 + $0x8] sm:$0xff]
        %196 = vset.pattern.permute.xlu0 0
        %197 = vperm.xlu0 %196, %v193
        %v198 = vpop.permute.xlu0 %197
        %201 = vset.pattern.permute.xlu0 0
        %202 = vperm.xlu0 %201, %v194
        %v203 = vpop.permute.xlu0 %202
        %vm205 = vcmask 31744
        %v207 = vsel %vm205, %v190, 0
        %v210 = vsel %vm205, %v191, 0
        %vm212 = vcmask 1043456
        %v214 = vsel %vm212, %v192, 0
        %216 = vmatpush.msra.mxu0 0.0
        %217 = vmatpush.msra.mxu0 0.0
        %218 = vmatpush.msra.mxu0 0.0
        %219 = vmatpush.msra.mxu0 0.0
        %220 = vmatpush.msra.mxu0 0.0
        %221 = vmatpush.msra.mxu0 0.0
        %222 = vmatpush.msra.mxu0 0.0
        %223 = vmatpush.msra.mxu0 0.0
        %224 = vmatpush.msra.mxu0 0.0
        %225 = vmatpush.msra.mxu0 0.0
        %226 = vmatpush.msra.mxu0 0.0
        %227 = vmatpush.msra.mxu0 0.0
        %228 = vmatpush.msra.mxu0 0.0
        %229 = vmatpush.msra.mxu0 0.0
        %230 = vmatpush.msra.mxu0 0.0
        %231 = vmatpush.msra.mxu0 %v214
        %232 = vmatmul.f32.gmra.mxu0 %v207
        %v233 = vpop.f32.mrf.mxu0
        %v234 = vadd.f32 %v198, %v233
        %235 = vmatmul.f32.gmra.mxu0 %v210
        %v236 = vpop.f32.mrf.mxu0
        %v237 = vadd.f32 %v203, %v236
        %238 = vdwg.mxu0
        %v239 = vmax.f32 %v234, 0.0
        %v240 = vmax.f32 %v237, 0.0
        %241 = vst [vmem:[%s181] sm:$0xff] %v239
        %242 = vst [vmem:[%s181 + $0x8] sm:$0xff] %v240
        %s243 = sand.u32 %s106, 1
        %s244 = sand.u32 %s106, 1
        %s245 = smul.addr %s244, 16
        %s246 = scalar_lea.vmem [#allocation2], %s245
        // Predicated region
        $region33: #{pixel_shuffle_forward.1} parent=31 // pred_check
          %p247 = pneg %p116
        $region34: #{pixel_shuffle_forward.1} parent=31 // pred_check_branch
          %249 = sbr.rel (%p247) target = $region36
        $region35: #{pixel_shuffle_forward.1} parent=31 // pred_region
          %s250 = smul.addr %s18, 4
          %s251 = sadd.s32 %s19, %s250
          %s252 = smul.addr %s251, 8
          %s253 = scalar_lea.vmem %s3, %s252
          // Predicated region
          $region37: #{pixel_shuffle_forward.1} parent=35 // pred_check
            _
          $region38: #{pixel_shuffle_forward.1} parent=35 // pred_check_branch
            %255 = sbr.rel (0) target = $region40
          $region39: #{pixel_shuffle_forward.1} parent=35 // pred_region
            // Predicated region
            $region41: #{pixel_shuffle_forward.1} parent=39 // pred_check
              _
            $region42: #{pixel_shuffle_forward.1} parent=39 // pred_check_branch
              %257 = sbr.rel (0) target = $region44
            $region43: #{pixel_shuffle_forward.1} parent=39 // pred_region
              // Predicated region
              $region56: #{pixel_shuffle_forward.1} parent=43 // pred_check
                _
              $region57: #{pixel_shuffle_forward.1} parent=43 // pred_check_branch
                %275 = sbr.rel (0) target = $region59
              $region58: #{pixel_shuffle_forward.1} parent=43 // pred_region
                loop: start=0, step=1, limit=1
                $region60: #{pixel_shuffle_forward.1} parent=58 // loop_pre_header
                  _
                $region61: #{pixel_shuffle_forward.1} parent=58 // loop_header
                  %s277 = sphi 0, %s281
                  %p278 = scmp.ge.s32.totalorder %s277, 1
                  %s282 = sphi %s246, %s246
                  %s283 = sphi %s253, %s253
                $region62: #{pixel_shuffle_forward.1} parent=58 // loop_header_branch
                  %280 = sbr.rel (%p278) target = $region66
                $region63: #{pixel_shuffle_forward.1} parent=58 // loop_body
                  %v284 = vld [vmem:[%s282] sm:$0xff]
                  %285 = vst [vmem:[%s283] sm:$0xff] %v284
                  %v286 = vld [vmem:[%s282 + $0x8] sm:$0xff]
                  %287 = vst [vmem:[%s283 + $0x10] sm:$0xff] %v286
                $region64: #{pixel_shuffle_forward.1} parent=58 // loop_footer
                  %s281 = sadd.s32 1, %s277
                $region65: #{pixel_shuffle_forward.1} parent=58 // loop_footer_branch
                  %276 = sbr.rel target = $region61
                $region66: #{pixel_shuffle_forward.1} parent=58 // loop_exit
                  _
              $region59: #{pixel_shuffle_forward.1} parent=43 // pred_fallthru
                _
              // Predicated region
              $region67: #{pixel_shuffle_forward.1} parent=43 // pred_check
                _
              $region68: #{pixel_shuffle_forward.1} parent=43 // pred_check_branch
                %289 = sbr.rel target = $region70
              $region69: #{pixel_shuffle_forward.1} parent=43 // pred_region
                _
              $region70: #{pixel_shuffle_forward.1} parent=43 // pred_fallthru
                _
            $region44: #{pixel_shuffle_forward.1} parent=39 // pred_fallthru
              _
            // Predicated region
            $region45: #{pixel_shuffle_forward.1} parent=39 // pred_check
              _
            $region46: #{pixel_shuffle_forward.1} parent=39 // pred_check_branch
              %259 = sbr.rel target = $region48
            $region47: #{pixel_shuffle_forward.1} parent=39 // pred_region
              %s261 = ssub.s32 256, 1
              loop: start=0, step=1, limit=1
              $region49: #{pixel_shuffle_forward.1} parent=47 // loop_pre_header
                _
              $region50: #{pixel_shuffle_forward.1} parent=47 // loop_header
                %s263 = sphi 0, %s267
                %p264 = scmp.ge.s32.totalorder %s263, 1
                %s268 = sphi %s246, %s246
                %s269 = sphi %s253, %s253
              $region51: #{pixel_shuffle_forward.1} parent=47 // loop_header_branch
                %266 = sbr.rel (%p264) target = $region55
              $region52: #{pixel_shuffle_forward.1} parent=47 // loop_body
                %v270 = vld [vmem:[%s268] sm:%s261]
                %271 = vst [vmem:[%s269] sm:%s261] %v270
                %v272 = vld [vmem:[%s268 + $0x8] sm:%s261]
                %273 = vst [vmem:[%s269 + $0x10] sm:%s261] %v272
              $region53: #{pixel_shuffle_forward.1} parent=47 // loop_footer
                %s267 = sadd.s32 1, %s263
              $region54: #{pixel_shuffle_forward.1} parent=47 // loop_footer_branch
                %262 = sbr.rel target = $region50
              $region55: #{pixel_shuffle_forward.1} parent=47 // loop_exit
                _
            $region48: #{pixel_shuffle_forward.1} parent=39 // pred_fallthru
              _
          $region40: #{pixel_shuffle_forward.1} parent=35 // pred_fallthru
            _
          %290 = vnop
        $region36: #{pixel_shuffle_forward.1} parent=31 // pred_fallthru
          _
      $region32: #{pixel_shuffle_forward.1} parent=5 // pred_fallthru
        _
      %p291 = scmp.le.s32.totalorder 2, %s9
      // Predicated region
      $region71: #{pixel_shuffle_forward.1} parent=5 // pred_check
        %p292 = pneg %p291
      $region72: #{pixel_shuffle_forward.1} parent=5 // pred_check_branch
        %294 = sbr.rel (%p292) target = $region74
      $region73: #{pixel_shuffle_forward.1} parent=5 // pred_region
        %s295 = ssub.s32 %s9, 2
        // Predicated region
        $region75: #{pixel_shuffle_forward.1} parent=73 // pred_check
          %p296 = pneg %p122
        $region76: #{pixel_shuffle_forward.1} parent=73 // pred_check_branch
          %298 = sbr.rel (%p296) target = $region78
        $region77: #{pixel_shuffle_forward.1} parent=73 // pred_region
          %s299 = sand.u32 %s107, 1
          %s300 = sand.u32 %s107, 1
          %s301 = smul.addr %s300, 16
          %s302 = scalar_lea.vmem [#allocation2], %s301
        $region78: #{pixel_shuffle_forward.1} parent=73 // pred_fallthru
          _
      $region74: #{pixel_shuffle_forward.1} parent=5 // pred_fallthru
        _
    $region6: #{pixel_shuffle_forward.1} parent=1 // loop_footer
      %s13 = sadd.s32 1, %s9
    $region7: #{pixel_shuffle_forward.1} parent=1 // loop_footer_branch
      %8 = sbr.rel target = $region3
    $region8: #{pixel_shuffle_forward.1} parent=1 // loop_exit
      _

</llo_original>
